<compile_context>
chip_gen: v7x
topology: tpu7x:2x2x1
jax: 0.10.0
libtpu: 0.0.40
codegen_flags: <defaults>
</compile_context>

<pallas_src>
import jax
import jax.numpy as jnp
from jax.experimental import pallas as pl
from jax.experimental.pallas import tpu as pltpu

B = 4          # batch size (must equal 4 for the final linear to be valid)
H1 = 4         # linear:  1 -> 4
H2 = 2         # linear1: 4 -> 2

# Parameter slab layout (rows of an (8, 128) f32 tile, unused entries = 0):
#   row 0, cols 0:4  -> W1[:, 0]        (the 1->4 weights, as a lane row)
#   row 1, cols 0:4  -> b1
#   rows 2:6, cols 0:2 -> W2.T          (4, 2): batch on sublanes, out on lanes
#   row 6, cols 0:2  -> b2
_P_ROWS, _P_COLS = 8, 128


def model_kernel(x_ref, p_ref, o_ref):
    # x_ref : (B, 1)        f32
    # p_ref : (8, 128)      f32   (exactly one vreg)
    # o_ref : (1, 128)      f32   (lane-dense, unmasked store)
    x = x_ref[...]                                   # (B, 1)
    p = p_ref[...]                                   # (8, 128) single vld

    w1t = p[0:1, :]                                  # (1, 128) cols 0:4 real, rest 0
    b1 = p[1:2, :]                                   # (1, 128)
    w2t = p[2:2 + H1, :]                             # (4, 128) cols 0:2 real, rest 0
    b2 = p[6:7, :]                                   # (1, 128)

    # linear(1 -> 4) + relu, computed on the full lane width.  Padded lanes
    # give relu(0*x + 0) = 0, which cannot change the subsequent max because
    # every real relu output is >= 0.
    h = jnp.maximum(x * w1t + b1, 0.0)               # (B, 128)   VPU

    # per-batch max over lanes.
    m = jnp.max(h, axis=-1, keepdims=True)           # (B, 1)     XLU lane reduce

    # linear1(4 -> 2) as VPU multiply + sublane reduce: out[k] = sum_b m[b]*W2[k,b] + b2[k].
    # Padded lanes stay 0 (0-weights, 0-bias), so the full-width store is unmasked.
    out = jnp.sum(m * w2t, axis=0, keepdims=True) + b2   # (1, 128)
    o_ref[...] = out


def pack_params(w1, b1, w2, b2):
    """Build the single (8, 128) f32 parameter slab (do this once; weights are static)."""
    slab = jnp.zeros((_P_ROWS, _P_COLS), jnp.float32)
    slab = slab.at[0, 0:H1].set(w1.reshape(H1).astype(jnp.float32))       # W1 (4,1) -> row
    slab = slab.at[1, 0:H1].set(b1.astype(jnp.float32))
    slab = slab.at[2:2 + H1, 0:H2].set(w2.T.astype(jnp.float32))          # W2.T (4,2)
    slab = slab.at[6, 0:H2].set(b2.astype(jnp.float32))
    return slab


@jax.jit
def model_forward(x, params_slab):
    # x : (B, 1);  the PyTorch forward is only well-formed when B == 4.
    assert x.shape == (B, 1), x.shape
    assert B == H1, "final F.linear requires the batch dim to equal 4"
    out_row = pl.pallas_call(
        model_kernel,
        out_shape=jax.ShapeDtypeStruct((1, _P_COLS), jnp.float32),
        in_specs=[
            pl.BlockSpec(memory_space=pltpu.MemorySpace.VMEM),
            pl.BlockSpec(memory_space=pltpu.MemorySpace.VMEM),
        ],
        out_specs=pl.BlockSpec(memory_space=pltpu.MemorySpace.VMEM),
    )(x.astype(jnp.float32), params_slab)
    return out_row[0, :H2]                            # (2,)


def reference_forward(x, w1, b1, w2, b2):
    v1 = x[:, :, None]                                              # (B, 1, 1)
    v2 = jnp.maximum(jnp.einsum("bsd,hd->bsh", v1, w1) + b1, 0.0)   # (B, 1, 4)
    v2 = v2[:, 0, :]                                                # (B, 4)
    v3 = jnp.max(v2, axis=-1)                                       # (B,) == (4,)
    return jnp.dot(w2, v3) + b2                                     # (2,)


if __name__ == "__main__":
    key = jax.random.PRNGKey(0)
    kx, kw1, kb1, kw2, kb2 = jax.random.split(key, 5)

    x = jax.random.normal(kx, (B, 1), dtype=jnp.float32)
    # Deterministic synthetic parameters (PyTorch Linear shapes: (out, in)).
    w1 = jax.random.normal(kw1, (H1, 1), dtype=jnp.float32) * 0.5
    b1 = jax.random.normal(kb1, (H1,), dtype=jnp.float32) * 0.1
    w2 = jax.random.normal(kw2, (H2, H1), dtype=jnp.float32) * 0.5
    b2 = jax.random.normal(kb2, (H2,), dtype=jnp.float32) * 0.1

    params = pack_params(w1, b1, w2, b2)              # packed once (static weights)

    out = model_forward(x, params)
    out = jax.block_until_ready(out)

    ref = reference_forward(x, w1, b1, w2, b2)
    assert out.shape == (H2,), out.shape
    assert jnp.allclose(out, ref, atol=1e-5, rtol=1e-5), (out, ref)

    print("KERNEL_OK")
</pallas_src>

<mosaic_0001>
module attributes {stable_mosaic.version = 11 : i64} {
  func.func @model_kernel(%arg0: memref<4x1xf32, #tpu.memory_space<vmem>>, %arg1: memref<8x128xf32, #tpu.memory_space<vmem>>, %arg2: memref<1x128xf32, #tpu.memory_space<vmem>>) attributes {dimension_semantics = [], scalar_prefetch = 0 : i64, scratch_operands = 0 : i64, tpu.core_type = #tpu.core_type<tc>} {
    %c0 = arith.constant 0 : index
    %c0_0 = arith.constant 0 : index
    %0 = vector.load %arg0[%c0, %c0_0] : memref<4x1xf32, #tpu.memory_space<vmem>>, vector<4x1xf32>
    %c0_1 = arith.constant 0 : index
    %c0_2 = arith.constant 0 : index
    %1 = vector.load %arg1[%c0_1, %c0_2] : memref<8x128xf32, #tpu.memory_space<vmem>>, vector<8x128xf32>
    %2 = vector.extract_strided_slice %1 {offsets = [0, 0], sizes = [1, 128], strides = [1, 1]} : vector<8x128xf32> to vector<1x128xf32>
    %3 = vector.extract_strided_slice %1 {offsets = [1, 0], sizes = [1, 128], strides = [1, 1]} : vector<8x128xf32> to vector<1x128xf32>
    %4 = vector.extract_strided_slice %1 {offsets = [2, 0], sizes = [4, 128], strides = [1, 1]} : vector<8x128xf32> to vector<4x128xf32>
    %5 = vector.extract_strided_slice %1 {offsets = [6, 0], sizes = [1, 128], strides = [1, 1]} : vector<8x128xf32> to vector<1x128xf32>
    %6 = vector.broadcast %0 : vector<4x1xf32> to vector<4x128xf32>
    %7 = vector.broadcast %2 : vector<1x128xf32> to vector<4x128xf32>
    %8 = arith.mulf %6, %7 : vector<4x128xf32>
    %9 = vector.broadcast %3 : vector<1x128xf32> to vector<4x128xf32>
    %10 = arith.addf %8, %9 : vector<4x128xf32>
    %cst = arith.constant 0.000000e+00 : f32
    %11 = vector.broadcast %cst : f32 to vector<4x128xf32>
    %12 = arith.maximumf %10, %11 : vector<4x128xf32>
    %cst_3 = arith.constant dense<0xFF800000> : vector<4xf32>
    %13 = vector.multi_reduction <maximumf>, %12, %cst_3 [1] : vector<4x128xf32> to vector<4xf32>
    %14 = vector.shape_cast %13 : vector<4xf32> to vector<4x1xf32>
    %15 = vector.broadcast %14 : vector<4x1xf32> to vector<4x128xf32>
    %16 = arith.mulf %15, %4 : vector<4x128xf32>
    %cst_4 = arith.constant dense<0.000000e+00> : vector<128xf32>
    %17 = vector.multi_reduction <add>, %16, %cst_4 [0] : vector<4x128xf32> to vector<128xf32>
    %18 = vector.shape_cast %17 : vector<128xf32> to vector<1x128xf32>
    %19 = arith.addf %18, %5 : vector<1x128xf32>
    %c0_5 = arith.constant 0 : index
    %c0_6 = arith.constant 0 : index
    %20 = vector.load %arg2[%c0_5, %c0_6] : memref<1x128xf32, #tpu.memory_space<vmem>>, vector<1x128xf32>
    tpu.vector_store %arg2[%c0_5, %c0_6], %19 {strides = array<i32>} : memref<1x128xf32, #tpu.memory_space<vmem>>, vector<1x128xf32>,
    return
  }
}

</mosaic_0001>

<llo_original>
// kernel: model_forward.1
$region0: #{model_forward.1}
  #allocation0 [shape = 'u32[]', space=smem, size = 0x4, offset = 0x4, fixed_abs, tag = 'smem constant byte address 0x4 - core index']
  #allocation1 [shape = 'u32[144,128]{1,0:T(1,128)}', space=vmem, size = 0x12000, scoped, tag = 'internal scratch']
  %s0 = inlined_call_operand.vmem [shape: f32[4,1], index: 0, kind: input, shape index: {}]
  %s1 = inlined_call_operand.vmem [shape: f32[8,128], index: 1, kind: input, shape index: {}]
  %s2 = inlined_call_operand.vmem [shape: f32[1,128], index: 2, kind: output, shape index: {}]
  %s3 = sld [smem:[#allocation0]]
  $region18: #{model_forward.1} parent=0
    _
  %s5 = ssub.s32 1, %s3
  %s6 = scalar_select 0, %s5, %s3
  // Predicated region
  $region2: #{model_forward.1} parent=0 // pred_check
    _
  $region3: #{model_forward.1} parent=0 // pred_check_branch
    %8 = sbr.rel (0) target = $region5
  $region4: #{model_forward.1} parent=0 // pred_region
    _
  $region5: #{model_forward.1} parent=0 // pred_fallthru
    _
  // Predicated region
  $region6: #{model_forward.1} parent=0 // pred_check
    _
  $region7: #{model_forward.1} parent=0 // pred_check_branch
    %10 = sbr.rel (0) target = $region9
  $region8: #{model_forward.1} parent=0 // pred_region
    _
  $region9: #{model_forward.1} parent=0 // pred_fallthru
    _
  %v11 = vld [vmem:[%s0] sm:$0xf]
  %v12 = vld [vmem:[%s1] sm:$0xff]
  %14 = vset.pattern.permute.xlu0 0
  %15 = vperm.xlu0 %14, %v11
  %v16 = vpop.permute.xlu0 %15
  %v18 = vlaneseq
  %v19 = vshrl.u32 %v18, 7
  %v20 = vsub.s32 0, %v19
  %v21 = vrot.slane %v12, %v20
  %v22 = vmul.f32 %v16, %v21
  %v23 = vlaneseq
  %v24 = vshrl.u32 %v23, 7
  %v25 = vsub.s32 1, %v24
  %v26 = vrot.slane %v12, %v25
  %v27 = vadd.f32 %v22, %v26
  %v28 = vmax.f32 %v27, 0.0
  %vm29 = vcmask 1043456
  %v30 = vsel %vm29, %v28, -inf
  %31 = vmax.xlane.f32.xlu0 %v30
  %v32 = vpop.xlane.xlu0 %31
  %v34 = vrot.slane %v12, 2
  %v36 = vmul.f32 %v32, %v34
  %v37 = vsel %vm29, %v36, 0.0
  %v38 = vrot.slane %v37, 4
  %v39 = vadd.f32 %v37, %v38
  %v40 = vrot.slane %v39, 2
  %v41 = vadd.f32 %v39, %v40
  %v42 = vrot.slane %v41, 1
  %v43 = vadd.f32 %v41, %v42
  %v44 = vadd.f32 %v43, %v12
  %45 = vst [vmem:[%s2 - $0x6] sm:$0x40] %v44
  // Predicated region
  $region10: #{model_forward.1} parent=0 // pred_check
    _
  $region11: #{model_forward.1} parent=0 // pred_check_branch
    %47 = sbr.rel (0) target = $region13
  $region12: #{model_forward.1} parent=0 // pred_region
    _
  $region13: #{model_forward.1} parent=0 // pred_fallthru
    _
  // Predicated region
  $region14: #{model_forward.1} parent=0 // pred_check
    _
  $region15: #{model_forward.1} parent=0 // pred_check_branch
    %49 = sbr.rel (0) target = $region17
  $region16: #{model_forward.1} parent=0 // pred_region
    _
  $region17: #{model_forward.1} parent=0 // pred_fallthru
    _

</llo_original>
